<compile_context>
chip_gen: v6e
topology: v6e:2x2x1
jax: 0.10.0
libtpu: 0.0.40
codegen_flags: <defaults>
</compile_context>

<pallas_src>
import math

import jax
import jax.numpy as jnp
from jax.experimental import pallas as pl
from jax.experimental.pallas import tpu as pltpu

_SUBLANE = 8

# Per-step VMEM budget for pipeline buffers + in-kernel intermediates.  Kept
# conservative so the same sizing works on every generation once the scoped
# limit below is applied (v5e scoped default is 16 MiB, v7x physical is 64 MiB).
_VMEM_BUDGET_BYTES = 16 * 1024 * 1024
# Explicit scoped-VMEM limit: raises v5e's 16 MiB default, matches the
# v6e/v7x 32 MiB default, and leaves headroom under v7x's 64 MiB physical.
_VMEM_LIMIT_BYTES = 32 * 1024 * 1024
# Row-tile cap: ~512-row tiles already sit near the HBM roofline; keeping
# tiles <= 512 gives grid[0] >= 2 for most N so both v7x TensorCores get work.
_TILE_M_CAP = 512


def _round_up(x, m):
    return (x + m - 1) // m * m


def _node_apply_kernel(h_ref, hn_ref, w_ref, b_ref, o_ref):
    alpha = 0.8
    # Elementwise blend on the VPU, in f32 regardless of the streaming dtype.
    agg = (alpha * h_ref[...].astype(jnp.float32)
           + (1.0 - alpha) * hn_ref[...].astype(jnp.float32))
    # bf16 x bf16 -> f32 accumulate on the MXU (bf16-native on v5e/v6e/v7x).
    y = jnp.dot(agg.astype(jnp.bfloat16), w_ref[...],
                preferred_element_type=jnp.float32)
    y = y + b_ref[...]
    # Sigmoid on the EUP; cast on the store.
    o_ref[...] = jax.nn.sigmoid(y).astype(o_ref.dtype)


def prepare_params(weight, bias):
    """One-time parameter prep (hoisted out of the hot path).

    weight : [out_feats, in_feats]   (PyTorch nn.Linear layout)
    bias   : [out_feats]
    Returns (w_t, b2d):
      w_t : [in_feats, out_feats] bf16   (halves weight DMA bytes)
      b2d : [1, out_feats]        f32
    No feature padding: K is consumed as a full-dim block and output/weight
    columns tile raggedly, so the activations never need a hot-path pad.
    """
    w_t = weight.T.astype(jnp.bfloat16)
    b2d = bias.astype(jnp.float32).reshape(1, -1)
    return w_t, b2d


def node_apply_forward(h_self, h_neigh, w_t, b2d):
    """Fused forward: sigmoid((0.8*h_self + 0.2*h_neigh) @ W^T + b).

    h_self, h_neigh : [N, in_feats]   (bf16 recommended: the kernel is
                                       HBM-bound on these streams; f32 works)
    w_t             : [in_feats, out_feats] bf16   (from prepare_params)
    b2d             : [1, out_feats]        f32
    returns         : [N, out_feats] in h_self.dtype
    """
    N, in_feats = h_self.shape
    k_w, out_feats = w_t.shape
    assert k_w == in_feats and h_neigh.shape == (N, in_feats)

    in_bytes = jnp.dtype(h_self.dtype).itemsize
    out_dtype = h_self.dtype
    out_bytes = jnp.dtype(out_dtype).itemsize

    # --- column tile -------------------------------------------------------
    # Keep the whole bf16 weight resident unless the output is very wide; when
    # tiling, use 256-column multiples so the 256-wide v6e/v7x MXU stays full
    # (128-wide result tiles would halve MXU column utilization and double the
    # number of weight DMAs).
    if out_feats <= 1024:
        tile_n = out_feats
    else:
        tile_n = 512
    grid_n = pl.cdiv(out_feats, tile_n)

    # --- row tile ----------------------------------------------------------
    # Per-row VMEM: double-buffered input/output blocks plus the in-kernel
    # intermediates (agg f32, its bf16 copy, y f32) the body materializes.
    per_row = (2 * 2 * in_feats * in_bytes        # h_self + h_neigh, 2 buffers
               + 2 * tile_n * out_bytes           # output block, 2 buffers
               + 6 * in_feats                     # agg f32 + agg bf16
               + 4 * tile_n)                      # y f32
    weight_bytes = 2 * in_feats * tile_n * 2      # bf16 weight tile, 2 buffers
    bias_bytes = 2 * tile_n * 4
    # NOTE: when grid_n == 1 the weight/bias block index is constant, so
    # pipeline_mode=pl.Buffered(1) would halve their footprint; we budget for
    # default double-buffering instead to stay portable across jax versions.
    budget_rows = (_VMEM_BUDGET_BYTES - weight_bytes - bias_bytes) // per_row
    budget_rows = max(_SUBLANE, (budget_rows // _SUBLANE) * _SUBLANE)
    tile_m_cap = min(_TILE_M_CAP, budget_rows)

    # Balanced row split: all row tiles ~equal, so tiling never nearly doubles
    # the row count (e.g. N=8000 must not become two 7936-row tiles).
    rows = _round_up(N, _SUBLANE)
    num_row_tiles = pl.cdiv(rows, tile_m_cap)
    tile_m = _round_up(pl.cdiv(rows, num_row_tiles), _SUBLANE)
    grid_m = pl.cdiv(N, tile_m)

    # Grid order: rows outer, columns inner.  When grid_n > 1 the weight is
    # re-DMA'd once per row tile (grid_m * in_feats * out_feats * 2 bytes);
    # swapping the loops would instead re-stream the N*in_feats inputs per
    # column tile, which is far worse for typical GCN shapes (N >> out_feats).
    grid = (grid_m, grid_n)

    w_streams = 1 if grid_n == 1 else grid_m
    cost = pl.CostEstimate(
        flops=2 * N * in_feats * out_feats,
        transcendentals=N * out_feats,
        bytes_accessed=(2 * N * in_feats * in_bytes             # input streams
                        + w_streams * in_feats * out_feats * 2  # bf16 weight
                        + out_feats * 4                         # bias
                        + N * out_feats * out_bytes),           # output
    )

    return pl.pallas_call(
        _node_apply_kernel,
        out_shape=jax.ShapeDtypeStruct((N, out_feats), out_dtype),
        grid_spec=pltpu.PrefetchScalarGridSpec(
            num_scalar_prefetch=0,
            grid=grid,
            in_specs=[
                pl.BlockSpec((tile_m, in_feats), lambda i, j: (i, 0)),
                pl.BlockSpec((tile_m, in_feats), lambda i, j: (i, 0)),
                pl.BlockSpec((in_feats, tile_n), lambda i, j: (0, j)),
                pl.BlockSpec((1, tile_n), lambda i, j: (0, j)),
            ],
            out_specs=pl.BlockSpec((tile_m, tile_n), lambda i, j: (i, j)),
        ),
        compiler_params=pltpu.CompilerParams(
            dimension_semantics=("parallel", "parallel"),
            vmem_limit_bytes=_VMEM_LIMIT_BYTES,
        ),
        cost_estimate=cost,
    )(h_self, h_neigh, w_t, b2d)


def _xavier_uniform(key, out_feats, in_feats, dtype=jnp.float32):
    # torch.nn.init.xavier_uniform_: U(-a, a), a = sqrt(6 / (fan_in + fan_out))
    bound = math.sqrt(6.0 / (in_feats + out_feats))
    return jax.random.uniform(key, (out_feats, in_feats), dtype=dtype,
                              minval=-bound, maxval=bound)


def _reference(h_self, h_neigh, weight, bias):
    agg = 0.8 * h_self.astype(jnp.float32) + 0.2 * h_neigh.astype(jnp.float32)
    return jax.nn.sigmoid(agg @ weight.T + bias)


if __name__ == "__main__":
    key = jax.random.PRNGKey(0)
    k_h, k_hn, k_w, k_b = jax.random.split(key, 4)

    N = 8          # nodes in the batch
    in_feats = 32
    out_feats = 32

    # bf16 activations: recommended streaming dtype for this HBM-bound kernel
    # (halves the dominant input/output traffic); f32 inputs also work.
    h_self = jax.random.normal(k_h, (N, in_feats), dtype=jnp.float32).astype(jnp.bfloat16)
    h_neigh = jax.random.normal(k_hn, (N, in_feats), dtype=jnp.float32).astype(jnp.bfloat16)

    # Deterministic parameter init matching the module's __init__:
    # Linear weight: xavier_uniform; bias: PyTorch default U(-1/sqrt(in), 1/sqrt(in)).
    weight = _xavier_uniform(k_w, out_feats, in_feats)
    b_bound = 1.0 / math.sqrt(in_feats)
    bias = jax.random.uniform(k_b, (out_feats,), dtype=jnp.float32,
                              minval=-b_bound, maxval=b_bound)

    # One-time parameter preparation (hoisted out of the hot path).
    w_t, b2d = prepare_params(weight, bias)

    out = node_apply_forward(h_self, h_neigh, w_t, b2d)
    out = jax.block_until_ready(out)

    ref = _reference(h_self, h_neigh, weight, bias)
    assert out.shape == (N, out_feats)
    # bf16 activations/weight on the MXU -> loosened tolerance vs f32 reference.
    assert jnp.allclose(out.astype(jnp.float32), ref, atol=2e-2, rtol=2e-2), \
        "mismatch vs reference"

    print("KERNEL_OK")
</pallas_src>

<mosaic_0001>
module attributes {stable_mosaic.version = 11 : i64} {
  func.func @_node_apply_kernel(%arg0: i32, %arg1: i32, %arg2: memref<8x32xbf16, #tpu.memory_space<vmem>>, %arg3: memref<8x32xbf16, #tpu.memory_space<vmem>>, %arg4: memref<32x32xbf16, #tpu.memory_space<vmem>>, %arg5: memref<1x32xf32, #tpu.memory_space<vmem>>, %arg6: memref<8x32xbf16, #tpu.memory_space<vmem>>) attributes {dimension_semantics = [#tpu.dimension_semantics<parallel>, #tpu.dimension_semantics<parallel>], iteration_bounds = array<i64: 1, 1>, scalar_prefetch = 0 : i64, scratch_operands = 0 : i64, tpu.core_type = #tpu.core_type<tc>, window_params = [{transform_indices = @transform_0, window_bounds = array<i64: 8, 32>}, {transform_indices = @transform_1, window_bounds = array<i64: 8, 32>}, {transform_indices = @transform_2, window_bounds = array<i64: 32, 32>}, {transform_indices = @transform_3, window_bounds = array<i64: 1, 32>}, {transform_indices = @transform_4, window_bounds = array<i64: 8, 32>}]} {
    %c0 = arith.constant 0 : index
    %c0_0 = arith.constant 0 : index
    %0 = vector.load %arg2[%c0, %c0_0] : memref<8x32xbf16, #tpu.memory_space<vmem>>, vector<8x32xbf16>
    %1 = arith.extf %0 : vector<8x32xbf16> to vector<8x32xf32>
    %cst = arith.constant 8.000000e-01 : f32
    %2 = vector.broadcast %cst : f32 to vector<8x32xf32>
    %3 = arith.mulf %2, %1 : vector<8x32xf32>
    %c0_1 = arith.constant 0 : index
    %c0_2 = arith.constant 0 : index
    %4 = vector.load %arg3[%c0_1, %c0_2] : memref<8x32xbf16, #tpu.memory_space<vmem>>, vector<8x32xbf16>
    %5 = arith.extf %4 : vector<8x32xbf16> to vector<8x32xf32>
    %cst_3 = arith.constant 2.000000e-01 : f32
    %6 = vector.broadcast %cst_3 : f32 to vector<8x32xf32>
    %7 = arith.mulf %6, %5 : vector<8x32xf32>
    %8 = arith.addf %3, %7 : vector<8x32xf32>
    %9 = arith.truncf %8 : vector<8x32xf32> to vector<8x32xbf16>
    %c0_4 = arith.constant 0 : index
    %c0_5 = arith.constant 0 : index
    %10 = vector.load %arg4[%c0_4, %c0_5] : memref<32x32xbf16, #tpu.memory_space<vmem>>, vector<32x32xbf16>
    %cst_6 = arith.constant dense<0.000000e+00> : vector<8x32xf32>
    %11 = tpu.matmul %9, %10, %cst_6 {dimension_numbers = #tpu.dot_dimension_numbers<[1], [0], [0], [1], [0, 0, 1, 1], [], []>} : vector<8x32xbf16>, vector<32x32xbf16>, vector<8x32xf32> -> vector<8x32xf32>
    %c0_7 = arith.constant 0 : index
    %c0_8 = arith.constant 0 : index
    %12 = vector.load %arg5[%c0_7, %c0_8] : memref<1x32xf32, #tpu.memory_space<vmem>>, vector<1x32xf32>
    %13 = vector.broadcast %12 : vector<1x32xf32> to vector<8x32xf32>
    %14 = arith.addf %11, %13 : vector<8x32xf32>
    %15 = arith.negf %14 : vector<8x32xf32>
    %16 = math.exp %15 : vector<8x32xf32>
    %cst_9 = arith.constant 1.000000e+00 : f32
    %17 = vector.broadcast %cst_9 : f32 to vector<8x32xf32>
    %18 = arith.addf %17, %16 : vector<8x32xf32>
    %19 = arith.divf %17, %18 : vector<8x32xf32>
    %20 = arith.truncf %19 : vector<8x32xf32> to vector<8x32xbf16>
    %c0_10 = arith.constant 0 : index
    %c0_11 = arith.constant 0 : index
    %21 = vector.load %arg6[%c0_10, %c0_11] : memref<8x32xbf16, #tpu.memory_space<vmem>>, vector<8x32xbf16>
    tpu.vector_store %arg6[%c0_10, %c0_11], %20 {strides = array<i32>} : memref<8x32xbf16, #tpu.memory_space<vmem>>, vector<8x32xbf16>,
    return
  }
  func.func @transform_0(%arg0: i32, %arg1: i32) -> (i32, i32) {
    %c0_i32 = arith.constant 0 : i32
    %c0_i32_0 = arith.constant 0 : i32
    return %arg0, %c0_i32 : i32, i32
  }
  func.func @transform_1(%arg0: i32, %arg1: i32) -> (i32, i32) {
    %c0_i32 = arith.constant 0 : i32
    %c0_i32_0 = arith.constant 0 : i32
    return %arg0, %c0_i32 : i32, i32
  }
  func.func @transform_2(%arg0: i32, %arg1: i32) -> (i32, i32) {
    %c0_i32 = arith.constant 0 : i32
    %c0_i32_0 = arith.constant 0 : i32
    return %c0_i32, %arg1 : i32, i32
  }
  func.func @transform_3(%arg0: i32, %arg1: i32) -> (i32, i32) {
    %c0_i32 = arith.constant 0 : i32
    %c0_i32_0 = arith.constant 0 : i32
    return %c0_i32, %arg1 : i32, i32
  }
  func.func @transform_4(%arg0: i32, %arg1: i32) -> (i32, i32) {
    %c0_i32 = arith.constant 0 : i32
    return %arg0, %arg1 : i32, i32
  }
}

</mosaic_0001>

<llo_original>
// kernel: tpu_custom_call.1
$region0: #{tpu_custom_call.1}
  #allocation0 [shape = 'u32[]', space=smem, size = 0x4, offset = 0x4, fixed_abs, tag = 'smem constant byte address 0x4 - core index']
  #allocation1 [shape = 'u32[144,128]{1,0:T(1,128)}', space=vmem, size = 0x12000, scoped, tag = 'internal scratch']
  %s0 = inlined_call_operand.hbm [shape: bf16[8,32], index: 0, kind: input, shape index: {}]
  %s1 = inlined_call_operand.hbm [shape: bf16[8,32], index: 1, kind: input, shape index: {}]
  %s2 = inlined_call_operand.hbm [shape: bf16[32,32], index: 2, kind: input, shape index: {}]
  %s3 = inlined_call_operand.vmem [shape: f32[1,32], index: 3, kind: input, shape index: {}]
  %s4 = inlined_call_operand.hbm [shape: bf16[8,32], index: 4, kind: output, shape index: {}]
  %s5 = sld [smem:[#allocation0]]
  $region38: #{tpu_custom_call.1} parent=0
    _
  %s7 = ssub.s32 1, %s5
  %s8 = scalar_select 0, %s7, %s5
  $region1: #{tpu_custom_call.1} parent=0
    #allocation2 [shape = 'u8[2048]{0}', space=vmem, size = 0x800, scoped, tag = 'input window, operand 0, single buffered']
    #allocation3 [shape = 's32[1]{0}', space=sflag, size = 0x4, scoped, tag = 'scoped memory for tpu_custom_call.1']
    #allocation4 [shape = 's32[1]{0}', space=sflag, size = 0x4, scoped, tag = 'scoped memory for tpu_custom_call.1']
    #allocation5 [shape = 'u8[2048]{0}', space=vmem, size = 0x800, scoped, tag = 'input window, operand 1, single buffered']
    #allocation6 [shape = 's32[1]{0}', space=sflag, size = 0x4, scoped, tag = 'scoped memory for tpu_custom_call.1']
    #allocation7 [shape = 'u8[8192]{0}', space=vmem, size = 0x2000, scoped, tag = 'input window, operand 2, single buffered']
    #allocation8 [shape = 'u8[2048]{0}', space=vmem, size = 0x800, scoped, tag = 'output window, operand 0, single buffered']
    %9 = vsyncpa [#allocation3], 0
    %10 = vsyncpa [#allocation6], 0
    %11 = vsyncpa [#allocation4], 0
    // Predicated region
    $region2: #{tpu_custom_call.1} parent=1 // pred_check
      _
    $region3: #{tpu_custom_call.1} parent=1 // pred_check_branch
      %13 = sbr.rel (0) target = $region5
    $region4: #{tpu_custom_call.1} parent=1 // pred_region
      %s15 = ssub.s32 64, 64
      %16 = vsyncadd [#allocation3], %s15
      %s18 = sshll.u32 [#allocation2], 4
      %s19 = int_to_ptr.vmem [resolvable:$true] %s18
      %21 = dma.hbm_to_vmem [thread:$0]  %s0, 64, %s19, [#allocation3]
    $region5: #{tpu_custom_call.1} parent=1 // pred_fallthru
      _
    // Predicated region
    $region6: #{tpu_custom_call.1} parent=1 // pred_check
      _
    $region7: #{tpu_custom_call.1} parent=1 // pred_check_branch
      %23 = sbr.rel (0) target = $region9
    $region8: #{tpu_custom_call.1} parent=1 // pred_region
      %s25 = ssub.s32 64, 64
      %26 = vsyncadd [#allocation6], %s25
      %s28 = sshll.u32 [#allocation5], 4
      %s29 = int_to_ptr.vmem [resolvable:$true] %s28
      %31 = dma.hbm_to_vmem [thread:$0]  %s1, 64, %s29, [#allocation6]
    $region9: #{tpu_custom_call.1} parent=1 // pred_fallthru
      _
    // Predicated region
    $region10: #{tpu_custom_call.1} parent=1 // pred_check
      _
    $region11: #{tpu_custom_call.1} parent=1 // pred_check_branch
      %33 = sbr.rel (0) target = $region13
    $region12: #{tpu_custom_call.1} parent=1 // pred_region
      %s35 = ssub.s32 256, 256
      %36 = vsyncadd [#allocation6], %s35
      %s37 = sshll.u32 [#allocation7], 4
      %s38 = int_to_ptr.vmem [resolvable:$true] %s37
      %43 = dma.hbm_to_vmem [thread:$0]  %s2, 256, %s38, [#allocation6], 64, 64, 4
    $region13: #{tpu_custom_call.1} parent=1 // pred_fallthru
      _
    // Predicated region
    $region14: #{tpu_custom_call.1} parent=1 // pred_check
      _
    $region15: #{tpu_custom_call.1} parent=1 // pred_check_branch
      %45 = sbr.rel (0) target = $region17
    $region16: #{tpu_custom_call.1} parent=1 // pred_region
      _
    $region17: #{tpu_custom_call.1} parent=1 // pred_fallthru
      _
    // Predicated region
    $region18: #{tpu_custom_call.1} parent=1 // pred_check
      _
    $region19: #{tpu_custom_call.1} parent=1 // pred_check_branch
      %47 = sbr.rel (0) target = $region21
    $region20: #{tpu_custom_call.1} parent=1 // pred_region
      %48 = dma.done [#allocation3], 64
    $region21: #{tpu_custom_call.1} parent=1 // pred_fallthru
      _
    // Predicated region
    $region22: #{tpu_custom_call.1} parent=1 // pred_check
      _
    $region23: #{tpu_custom_call.1} parent=1 // pred_check_branch
      %50 = sbr.rel (0) target = $region25
    $region24: #{tpu_custom_call.1} parent=1 // pred_region
      %51 = dma.done [#allocation6], 64
    $region25: #{tpu_custom_call.1} parent=1 // pred_fallthru
      _
    // Predicated region
    $region26: #{tpu_custom_call.1} parent=1 // pred_check
      _
    $region27: #{tpu_custom_call.1} parent=1 // pred_check_branch
      %53 = sbr.rel (0) target = $region29
    $region28: #{tpu_custom_call.1} parent=1 // pred_region
      %54 = dma.done [#allocation6], 256
    $region29: #{tpu_custom_call.1} parent=1 // pred_fallthru
      _
    %v56 = vld [vmem:[#allocation2] sm:$0xf]
    %v57 = vunpack.c.l.bf16 %v56
    %v58 = vmul.f32 %v57, 0.8
    %v59 = vld [vmem:[#allocation5] sm:$0xf]
    %v60 = vunpack.c.l.bf16 %v59
    %v61 = vmul.f32 %v60, 0.2
    %v62 = vadd.f32 %v58, %v61
    %v63 = vpack.c.bf16 %v62, %v62
    %v64 = vld [vmem:[#allocation7] sm:$0xf]
    %v65 = vld [vmem:[#allocation7 + $0x4] sm:$0xf]
    %v66 = vld [vmem:[#allocation7 + $0x8] sm:$0xf]
    %v67 = vld [vmem:[#allocation7 + $0xc] sm:$0xf]
    %v68 = vld [vmem:[%s3] sm:$0x1]
    %v70 = vlaneseq
    %v71 = vshrl.u32 %v70, 7
    %v72 = vsub.s32 0, %v71
    %v73 = vrot.slane %v68, %v72
    %v79 = vunpack.c.l.b16 %v64
    %v80 = vunpack.c.l.b16 %v65
    %v81 = vunpack.c.l.b16 %v66
    %v82 = vunpack.c.l.b16 %v67
    %v83 = vpack.c.b16 %v80, %v79
    %v84 = vpack.c.b16 %v82, %v81
    %vm87 = vcmask 261120
    %v89 = vsel %vm87, %v63, 0
    %91 = vmatprep.subr.bf16.mxu0 0
    %92 = vmatpush1.bf16.msra.mxu0 0
    %93 = vmatprep.subr.bf16.mxu0 0
    %94 = vmatpush1.bf16.msra.mxu0 0
    %95 = vmatprep.subr.bf16.mxu0 0
    %96 = vmatpush1.bf16.msra.mxu0 0
    %97 = vmatprep.subr.bf16.mxu0 0
    %98 = vmatpush1.bf16.msra.mxu0 0
    %99 = vmatprep.subr.bf16.mxu0 0
    %100 = vmatpush1.bf16.msra.mxu0 0
    %101 = vmatprep.subr.bf16.mxu0 0
    %102 = vmatpush1.bf16.msra.mxu0 0
    %103 = vmatprep.subr.bf16.mxu0 0
    %104 = vmatpush1.bf16.msra.mxu0 %v84
    %105 = vmatprep.subr.bf16.mxu0 0
    %106 = vmatpush1.bf16.msra.mxu0 %v83
    %107 = vmatprep.subr.bf16.mxu0 0
    %108 = vmatpush2.bf16.msra.mxu0 0
    %109 = vmatprep.subr.bf16.mxu0 0
    %110 = vmatpush2.bf16.msra.mxu0 0
    %111 = vmatprep.subr.bf16.mxu0 0
    %112 = vmatpush2.bf16.msra.mxu0 0
    %113 = vmatprep.subr.bf16.mxu0 0
    %114 = vmatpush2.bf16.msra.mxu0 0
    %115 = vmatprep.subr.bf16.mxu0 0
    %116 = vmatpush2.bf16.msra.mxu0 0
    %117 = vmatprep.subr.bf16.mxu0 0
    %118 = vmatpush2.bf16.msra.mxu0 0
    %119 = vmatprep.subr.bf16.mxu0 0
    %120 = vmatpush2.bf16.msra.mxu0 0
    %121 = vmatprep.subr.bf16.mxu0 0
    %122 = vmatpush2.bf16.msra.mxu0 0
    %123 = vmatprep.mubr.bf16.mxu0 0
    %124 = vmatmul.mubr.bf16.gmra.mxu0 %v89
    %v125 = vpop.f32.mrf.mxu0
    %v126 = vadd.f32 %v73, %v125
    %v127 = vpop.f32.mrf.mxu0
    %v128 = vpop.f32.mrf.mxu0
    %v129 = vpop.f32.mrf.mxu0
    %130 = vdwg.mxu0
    %v131 = vxor.u32 %v126, 2147483648
    %v132 = vmul.f32 %v131, 1.442695
    %v133 = vpow.pop %v132
    %v134 = vadd.f32 %v133, 1.0
    %v135 = vrcp.pop %v134
    %v136 = vmul.f32 1.0, %v135
    %v137 = vpack.c.bf16 %v136, %v136
    %vm138 = vcmask 257024
    %139 = vst.msk [vmem:[#allocation8] sm:$0xf] %vm138, %v137
    // Predicated region
    $region30: #{tpu_custom_call.1} parent=1 // pred_check
      _
    $region31: #{tpu_custom_call.1} parent=1 // pred_check_branch
      %141 = sbr.rel (0) target = $region33
    $region32: #{tpu_custom_call.1} parent=1 // pred_region
      %s143 = ssub.s32 64, 64
      %144 = vsyncadd [#allocation4], %s143
      %s146 = sshll.u32 [#allocation8], 4
      %s147 = int_to_ptr.vmem [resolvable:$true] %s146
      %149 = dma.vmem_to_hbm [thread:$0]  %s147, 64, %s4, [#allocation4]
    $region33: #{tpu_custom_call.1} parent=1 // pred_fallthru
      _
    // Predicated region
    $region34: #{tpu_custom_call.1} parent=1 // pred_check
      _
    $region35: #{tpu_custom_call.1} parent=1 // pred_check_branch
      %151 = sbr.rel (0) target = $region37
    $region36: #{tpu_custom_call.1} parent=1 // pred_region
      %152 = dma.done [#allocation4], 64
    $region37: #{tpu_custom_call.1} parent=1 // pred_fallthru
      _
    %153 = vsyncpa [#allocation3], 1
    %154 = vsyncpa [#allocation6], 1
    %155 = vsyncpa [#allocation4], 1

</llo_original>
